<compile_context>
chip_gen: v6e
topology: v6e:2x2x1
jax: 0.10.0
libtpu: 0.0.40
codegen_flags: <defaults>
</compile_context>

<pallas_src>
import functools
import math

import jax
import jax.numpy as jnp
from jax.experimental import pallas as pl
from jax.experimental.pallas import tpu as pltpu


def _sigmoid(x):
    return 0.5 * (jnp.tanh(0.5 * x) + 1.0)


def _softplus(x):
    return jnp.maximum(x, 0.0) + jnp.log(1.0 + jnp.exp(-jnp.abs(x)))


def _row_tile(m, parts=1):
    # prefer a tile that yields >= `parts` programs (v7x megacore) when legal
    if parts > 1 and m % parts == 0:
        t = m // parts
        if t == m or t % 8 == 0:
            return t
    for t in (512, 256, 128):
        if m % t == 0:
            return t
    return m


def _seq_tile(length):
    for t in (512, 256, 128, 64, 32, 16, 8):
        if length % t == 0:
            return t
    return length


def _time_chunk(lt, b, n, d):
    # cap the unrolled chunk so (B,2,T,N,D) f32 temporaries stay ~<=128KB each
    budget = 128 * 1024
    per_step = max(b * 2 * n * d * 4, 1)
    tmax = max(1, budget // per_step)
    for t in (8, 4, 2):
        if lt % t == 0 and t <= tmax:
            return t
    return 1


_PARALLEL1 = pltpu.CompilerParams(dimension_semantics=("parallel",))


# --------------------------- generic fused matmul kernels -------------------

def _ln_matmul_kernel(x_ref, g_ref, bb_ref, w_ref, b_ref, o_ref):
    x = x_ref[...]
    mu = jnp.mean(x, axis=-1, keepdims=True)
    xc = x - mu
    var = jnp.mean(xc * xc, axis=-1, keepdims=True)
    xn = xc * jax.lax.rsqrt(var + 1e-5) * g_ref[...] + bb_ref[...]
    o_ref[...] = jnp.dot(xn.astype(jnp.bfloat16), w_ref[...],
                         preferred_element_type=jnp.float32) + b_ref[...]


@functools.partial(jax.jit, static_argnames=("parts",))
def ln_linear(x, g, bshift, w, b, parts=1):
    """LayerNorm(x) @ w + b (w pre-cast bf16); x: (M, K)."""
    M, K = x.shape
    N = w.shape[1]
    tm = _row_tile(M, parts)
    return pl.pallas_call(
        _ln_matmul_kernel,
        out_shape=jax.ShapeDtypeStruct((M, N), jnp.float32),
        grid=(M // tm,),
        in_specs=[pl.BlockSpec((tm, K), lambda i: (i, 0)),
                  pl.BlockSpec((1, K), lambda i: (0, 0)),
                  pl.BlockSpec((1, K), lambda i: (0, 0)),
                  pl.BlockSpec((K, N), lambda i: (0, 0)),
                  pl.BlockSpec((1, N), lambda i: (0, 0))],
        out_specs=pl.BlockSpec((tm, N), lambda i: (i, 0)),
        compiler_params=_PARALLEL1,
    )(x, g, bshift, w, b)


def _matmul_ln_kernel(x_ref, w_ref, b_ref, g_ref, bb_ref, o_ref):
    y = jnp.dot(x_ref[...].astype(jnp.bfloat16), w_ref[...],
                preferred_element_type=jnp.float32) + b_ref[...]
    mu = jnp.mean(y, axis=-1, keepdims=True)
    yc = y - mu
    var = jnp.mean(yc * yc, axis=-1, keepdims=True)
    o_ref[...] = yc * jax.lax.rsqrt(var + 1e-5) * g_ref[...] + bb_ref[...]


@functools.partial(jax.jit, static_argnames=("parts",))
def linear_ln(x, w, b, g, bshift, parts=1):
    """(x @ w + b) then LayerNorm over the output; used by patch-embed."""
    M, K = x.shape
    N = w.shape[1]
    tm = _row_tile(M, parts)
    return pl.pallas_call(
        _matmul_ln_kernel,
        out_shape=jax.ShapeDtypeStruct((M, N), jnp.float32),
        grid=(M // tm,),
        in_specs=[pl.BlockSpec((tm, K), lambda i: (i, 0)),
                  pl.BlockSpec((K, N), lambda i: (0, 0)),
                  pl.BlockSpec((1, N), lambda i: (0, 0)),
                  pl.BlockSpec((1, N), lambda i: (0, 0)),
                  pl.BlockSpec((1, N), lambda i: (0, 0))],
        out_specs=pl.BlockSpec((tm, N), lambda i: (i, 0)),
        compiler_params=_PARALLEL1,
    )(x, w, b, g, bshift)


def _expand_ln_kernel(x_ref, w_ref, b_ref, g_ref, bb_ref, o_ref):
    xe = jnp.dot(x_ref[...].astype(jnp.bfloat16), w_ref[...],
                 preferred_element_type=jnp.float32) + b_ref[...]
    c_out = g_ref.shape[-1]
    groups = xe.shape[-1] // c_out
    gam = g_ref[...]
    bet = bb_ref[...]
    parts = []
    for gi in range(groups):
        seg = xe[:, gi * c_out:(gi + 1) * c_out]
        mu = jnp.mean(seg, axis=-1, keepdims=True)
        sc = seg - mu
        var = jnp.mean(sc * sc, axis=-1, keepdims=True)
        parts.append(sc * jax.lax.rsqrt(var + 1e-5) * gam + bet)
    o_ref[...] = jnp.concatenate(parts, axis=-1)


@functools.partial(jax.jit, static_argnames=("parts",))
def expand_ln(x, w, b, g, bshift, parts=1):
    """PatchExpand linear with the per-group (c_out) LayerNorm fused in."""
    M, K = x.shape
    P = w.shape[1]
    c_out = g.shape[1]
    tm = _row_tile(M, parts)
    return pl.pallas_call(
        _expand_ln_kernel,
        out_shape=jax.ShapeDtypeStruct((M, P), jnp.float32),
        grid=(M // tm,),
        in_specs=[pl.BlockSpec((tm, K), lambda i: (i, 0)),
                  pl.BlockSpec((K, P), lambda i: (0, 0)),
                  pl.BlockSpec((1, P), lambda i: (0, 0)),
                  pl.BlockSpec((1, c_out), lambda i: (0, 0)),
                  pl.BlockSpec((1, c_out), lambda i: (0, 0))],
        out_specs=pl.BlockSpec((tm, P), lambda i: (i, 0)),
        compiler_params=_PARALLEL1,
    )(x, w, b, g, bshift)


def _final_expand_head_kernel(x_ref, w_ref, b_ref, g_ref, bb_ref,
                              wh_ref, bh_ref, o_ref):
    xe = jnp.dot(x_ref[...].astype(jnp.bfloat16), w_ref[...],
                 preferred_element_type=jnp.float32) + b_ref[...]
    c_out = g_ref.shape[-1]
    groups = xe.shape[-1] // c_out
    gam = g_ref[...]
    bet = bb_ref[...]
    parts = []
    for gi in range(groups):
        seg = xe[:, gi * c_out:(gi + 1) * c_out]
        mu = jnp.mean(seg, axis=-1, keepdims=True)
        sc = seg - mu
        var = jnp.mean(sc * sc, axis=-1, keepdims=True)
        parts.append(sc * jax.lax.rsqrt(var + 1e-5) * gam + bet)
    normed = jnp.concatenate(parts, axis=-1)
    o_ref[...] = jnp.dot(normed.astype(jnp.bfloat16), wh_ref[...],
                         preferred_element_type=jnp.float32) + bh_ref[...]


@functools.partial(jax.jit, static_argnames=("parts",))
def final_expand_head(x, w, b, g, bshift, w_head, b_head, parts=1):
    """Final 4x expand + per-group LN + block-diagonal 1x1 conv head, one kernel."""
    M, K = x.shape
    P = w.shape[1]
    O = w_head.shape[1]
    c_out = g.shape[1]
    tm = _row_tile(M, parts)
    return pl.pallas_call(
        _final_expand_head_kernel,
        out_shape=jax.ShapeDtypeStruct((M, O), jnp.float32),
        grid=(M // tm,),
        in_specs=[pl.BlockSpec((tm, K), lambda i: (i, 0)),
                  pl.BlockSpec((K, P), lambda i: (0, 0)),
                  pl.BlockSpec((1, P), lambda i: (0, 0)),
                  pl.BlockSpec((1, c_out), lambda i: (0, 0)),
                  pl.BlockSpec((1, c_out), lambda i: (0, 0)),
                  pl.BlockSpec((P, O), lambda i: (0, 0)),
                  pl.BlockSpec((1, O), lambda i: (0, 0))],
        out_specs=pl.BlockSpec((tm, O), lambda i: (i, 0)),
        compiler_params=_PARALLEL1,
    )(x, w, b, g, bshift, w_head, b_head)


# --------------------------- VSSBlock kernels --------------------------------

def _ln_inproj_conv_kernel(x_ref, g_ref, b_ref, wi_ref, bi_ref, cw_ref, cb_ref,
                           xc_ref, z_ref, xp_ref):
    """Fused LayerNorm + in_proj + depthwise 3x3 conv (pad=1) + SiLU, per batch.

    x_ref: (1,H,W,C); wi_ref: (C, 2Di) bf16; cw_ref: (3,3,Di)
    outputs: xc_ref (1,H,W,Di) conv path, z_ref (1,L,Di) gate path
    xp_ref: VMEM scratch (1, H+2, W+2, Di) -- only the halo ring is zeroed
    """
    H = x_ref.shape[1]
    W = x_ref.shape[2]
    C = x_ref.shape[3]
    Di = xc_ref.shape[3]
    L = H * W

    x = x_ref[0].reshape(L, C)
    mu = jnp.mean(x, axis=-1, keepdims=True)
    xc = x - mu
    var = jnp.mean(xc * xc, axis=-1, keepdims=True)
    xn = xc * jax.lax.rsqrt(var + 1e-5) * g_ref[...] + b_ref[...]
    xz = jnp.dot(xn.astype(jnp.bfloat16), wi_ref[...],
                 preferred_element_type=jnp.float32) + bi_ref[...]

    z_ref[0] = xz[:, Di:]

    # depthwise conv input staged in padded scratch; zero only the halo ring
    zrow = jnp.zeros((1, 1, W + 2, Di), jnp.float32)
    zcol = jnp.zeros((1, H + 2, 1, Di), jnp.float32)
    xp_ref[:, 0:1, :, :] = zrow
    xp_ref[:, H + 1:H + 2, :, :] = zrow
    xp_ref[:, :, 0:1, :] = zcol
    xp_ref[:, :, W + 1:W + 2, :] = zcol
    xp_ref[:, 1:H + 1, 1:W + 1, :] = xz[:, :Di].reshape(1, H, W, Di)

    acc = jnp.zeros((1, H, W, Di), jnp.float32)
    for i in range(3):
        for j in range(3):
            acc = acc + xp_ref[:, i:i + H, j:j + W, :] * cw_ref[i, j:j + 1, :]
    acc = acc + cb_ref[...]
    xc_ref[...] = acc * _sigmoid(acc)                       # SiLU


@jax.jit
def ln_inproj_dwconv(x, ln_g, ln_b, wi, bi, cw, cb):
    B, H, W, C = x.shape
    Di = cw.shape[-1]
    L = H * W
    return pl.pallas_call(
        _ln_inproj_conv_kernel,
        out_shape=(jax.ShapeDtypeStruct((B, H, W, Di), jnp.float32),
                   jax.ShapeDtypeStruct((B, L, Di), jnp.float32)),
        grid=(B,),
        in_specs=[pl.BlockSpec((1, H, W, C), lambda b: (b, 0, 0, 0)),
                  pl.BlockSpec((1, C), lambda b: (0, 0)),
                  pl.BlockSpec((1, C), lambda b: (0, 0)),
                  pl.BlockSpec((C, 2 * Di), lambda b: (0, 0)),
                  pl.BlockSpec((1, 2 * Di), lambda b: (0, 0)),
                  pl.BlockSpec((3, 3, Di), lambda b: (0, 0, 0)),
                  pl.BlockSpec((1, Di), lambda b: (0, 0))],
        out_specs=(pl.BlockSpec((1, H, W, Di), lambda b: (b, 0, 0, 0)),
                   pl.BlockSpec((1, L, Di), lambda b: (b, 0, 0))),
        scratch_shapes=[pltpu.VMEM((1, H + 2, W + 2, Di), jnp.float32)],
        compiler_params=_PARALLEL1,
    )(x, ln_g, ln_b, wi, bi, cw, cb)


def _proj_streams_kernel(xc_ref, w_ref, u_ref, dtf_ref, dtb_ref, bcf_ref, bcb_ref):
    """Fused x_proj + dt_proj for both token streams, emits scan-layout slabs.

    xc_ref: (1,H,W,Di); w_ref: (2, Di, 2Di+4N) bf16 (fused weights per stream).
    Outputs (per batch b): u (1,2,L,Di), dt fwd/bwd (1,2,L,Di), B|C fwd/bwd (1,2,L,2N).
    """
    H = xc_ref.shape[1]
    W = xc_ref.shape[2]
    Di = xc_ref.shape[3]
    twoN = bcf_ref.shape[3]
    L = H * W

    img = xc_ref[0]                                      # (H,W,Di)
    x0 = img.reshape(L, Di)                              # row-major tokens
    x1 = jnp.transpose(img, (1, 0, 2)).reshape(L, Di)    # col-major tokens
    w = w_ref[...]

    for s, xs in enumerate((x0, x1)):
        proj = jnp.dot(xs.astype(jnp.bfloat16), w[s],
                       preferred_element_type=jnp.float32)
        u_ref[0, s] = xs
        dtf_ref[0, s] = proj[:, :Di]
        dtb_ref[0, s] = proj[:, Di:2 * Di]
        bcf_ref[0, s] = proj[:, 2 * Di:2 * Di + twoN]
        bcb_ref[0, s] = proj[:, 2 * Di + twoN:]


@jax.jit
def proj_streams(xc, w2):
    B, H, W, Di = xc.shape
    P = w2.shape[-1]
    twoN = (P - 2 * Di) // 2
    L = H * W
    d_specs = tuple(pl.BlockSpec((1, 2, L, Di), lambda b: (b, 0, 0, 0))
                    for _ in range(3))
    bc_specs = tuple(pl.BlockSpec((1, 2, L, twoN), lambda b: (b, 0, 0, 0))
                     for _ in range(2))
    return pl.pallas_call(
        _proj_streams_kernel,
        out_shape=(jax.ShapeDtypeStruct((B, 2, L, Di), jnp.float32),
                   jax.ShapeDtypeStruct((B, 2, L, Di), jnp.float32),
                   jax.ShapeDtypeStruct((B, 2, L, Di), jnp.float32),
                   jax.ShapeDtypeStruct((B, 2, L, twoN), jnp.float32),
                   jax.ShapeDtypeStruct((B, 2, L, twoN), jnp.float32)),
        grid=(B,),
        in_specs=[pl.BlockSpec((1, H, W, Di), lambda b: (b, 0, 0, 0)),
                  pl.BlockSpec((2, Di, P), lambda b: (0, 0, 0))],
        out_specs=d_specs + bc_specs,
        compiler_params=_PARALLEL1,
    )(xc, w2)


def _scan_kernel(u_ref, dtf_ref, dtb_ref, bcf_ref, bcb_ref, a_ref, bias_ref,
                 dv_ref, y_ref, h_ref, *, chunk, nsub):
    """Selective scan; one grid program per direction group (fwd / bwd).

    u/dt refs: (B, 2, LT, Di); bc refs: (B, 2, LT, 2N) = [B | C];
    a_ref: (2,N,Di) = -exp(A_log); bias/dv: (2,1,Di); y_ref: (B,2,LT,Di) slab
    of the group's output rows; h_ref: VMEM scratch (B,2,N,Di).
    """
    g = pl.program_id(0)

    @pl.when(pl.program_id(1) == 0)
    def _init():
        h_ref[...] = jnp.zeros_like(h_ref)

    A = a_ref[...]
    dt_bias = bias_ref[...]
    d_vec = dv_ref[...]
    N = A.shape[1]
    T = chunk
    LT = u_ref.shape[2]

    def run(dt_ref, bc_ref, reverse):
        def sub(k, h):
            if reverse:
                start = LT - (k + 1) * T
            else:
                start = k * T
            start = pl.multiple_of(start, T)
            u_c = u_ref[:, :, pl.ds(start, T), :]                 # (B,2,T,D)
            dt_c = _softplus(dt_ref[:, :, pl.ds(start, T), :] + dt_bias)
            bc = bc_ref[:, :, pl.ds(start, T), :]                 # (B,2,T,2N)
            b_c = bc[..., :N]
            c_c = bc[..., N:]
            dtu = dt_c * u_c
            # hoisted off the serial recurrence: exp / b*dt*u chunk-wide
            dA = jnp.exp(dt_c[:, :, :, None, :] * A[:, None, :, :])  # (B,2,T,N,D)
            bu = b_c[..., None] * dtu[:, :, :, None, :]              # (B,2,T,N,D)
            ys = []
            steps = range(T - 1, -1, -1) if reverse else range(T)    # unrolled
            for j in steps:
                h = dA[:, :, j] * h + bu[:, :, j]
                ys.append(jnp.sum(c_c[:, :, j][..., None] * h, axis=2))
            if reverse:
                ys = ys[::-1]
            y_c = jnp.stack(ys, axis=2) + d_vec * u_c
            y_ref[:, :, pl.ds(start, T), :] = y_c
            return h

        h_out = jax.lax.fori_loop(0, nsub, sub, h_ref[...])
        h_ref[...] = h_out

    @pl.when(g == 0)
    def _fwd():
        run(dtf_ref, bcf_ref, reverse=False)

    @pl.when(g == 1)
    def _bwd():
        run(dtb_ref, bcb_ref, reverse=True)


@jax.jit
def selective_scan4(u, dt_f, dt_b, bc_f, bc_b, a_neg, dt_bias, d_vec):
    """All 4 direction scans in one pallas_call; outputs in forward spatial order.

    u, dt_*: (B,2,L,Di); bc_*: (B,2,L,2N); a_neg/dt_bias/d_vec: (4,*,Di) dir-major
    (dirs 0,1 = forward group; 2,3 = backward group).  Returns y: (B,4,L,Di).
    """
    B, _, L, Di = u.shape
    N = a_neg.shape[1]
    LT = _seq_tile(L)
    nb = L // LT
    T = _time_chunk(LT, B, N, Di)
    nsub = LT // T

    seq_map = lambda g, c: (0, 0, c * (1 - g) + (nb - 1 - c) * g, 0)
    out_map = lambda g, c: (0, g, c * (1 - g) + (nb - 1 - c) * g, 0)
    par_map = lambda g, c: (g, 0, 0)

    kernel = functools.partial(_scan_kernel, chunk=T, nsub=nsub)
    return pl.pallas_call(
        kernel,
        out_shape=jax.ShapeDtypeStruct((B, 4, L, Di), jnp.float32),
        grid=(2, nb),
        in_specs=[pl.BlockSpec((B, 2, LT, Di), seq_map),     # u
                  pl.BlockSpec((B, 2, LT, Di), seq_map),     # dt forward group
                  pl.BlockSpec((B, 2, LT, Di), seq_map),     # dt backward group
                  pl.BlockSpec((B, 2, LT, 2 * N), seq_map),  # B|C forward
                  pl.BlockSpec((B, 2, LT, 2 * N), seq_map),  # B|C backward
                  pl.BlockSpec((2, N, Di), par_map),         # A = -exp(A_log)
                  pl.BlockSpec((2, 1, Di), par_map),         # dt bias
                  pl.BlockSpec((2, 1, Di), par_map)],        # D skip vector
        out_specs=pl.BlockSpec((B, 2, LT, Di), out_map),
        scratch_shapes=[pltpu.VMEM((B, 2, N, Di), jnp.float32)],
        compiler_params=pltpu.CompilerParams(
            dimension_semantics=("parallel", "arbitrary")),
    )(u, dt_f, dt_b, bc_f, bc_b, a_neg, dt_bias, d_vec)


def _ss2d_tail_kernel(y_ref, z_ref, g_ref, bb_ref, w_ref, b_ref, x_ref, o_ref):
    """Fused direction merge (incl. col->row transpose) + out_norm + SiLU gate +
    out_proj + residual; per batch.
    y_ref: (1,4,L,Di) [row-fwd, col-fwd, row-bwd, col-bwd]; x_ref/o_ref: (1,H,W,C)."""
    H = x_ref.shape[1]
    W = x_ref.shape[2]
    C = x_ref.shape[3]
    Di = z_ref.shape[2]
    L = H * W

    y_row = y_ref[0, 0] + y_ref[0, 2]
    y_col = (y_ref[0, 1] + y_ref[0, 3]).reshape(W, H, Di)
    y_col = jnp.transpose(y_col, (1, 0, 2)).reshape(L, Di)
    y = y_row + y_col

    mu = jnp.mean(y, axis=-1, keepdims=True)
    yc = y - mu
    var = jnp.mean(yc * yc, axis=-1, keepdims=True)
    yn = yc * jax.lax.rsqrt(var + 1e-5) * g_ref[...] + bb_ref[...]

    z = z_ref[0]
    gated = yn * (z * _sigmoid(z))
    resid = x_ref[0].reshape(L, C)
    out = (jnp.dot(gated.astype(jnp.bfloat16), w_ref[...],
                   preferred_element_type=jnp.float32)
           + b_ref[...] + resid)
    o_ref[0] = out.reshape(H, W, C)


@jax.jit
def ss2d_tail(y, z, x, ong, onb, wo, bo):
    B, H, W, C = x.shape
    L = H * W
    Di = z.shape[-1]
    return pl.pallas_call(
        _ss2d_tail_kernel,
        out_shape=jax.ShapeDtypeStruct((B, H, W, C), jnp.float32),
        grid=(B,),
        in_specs=[pl.BlockSpec((1, 4, L, Di), lambda b: (b, 0, 0, 0)),
                  pl.BlockSpec((1, L, Di), lambda b: (b, 0, 0)),
                  pl.BlockSpec((1, Di), lambda b: (0, 0)),
                  pl.BlockSpec((1, Di), lambda b: (0, 0)),
                  pl.BlockSpec((Di, C), lambda b: (0, 0)),
                  pl.BlockSpec((1, C), lambda b: (0, 0)),
                  pl.BlockSpec((1, H, W, C), lambda b: (b, 0, 0, 0))],
        out_specs=pl.BlockSpec((1, H, W, C), lambda b: (b, 0, 0, 0)),
        compiler_params=_PARALLEL1,
    )(y, z, ong, onb, wo, bo, x)


# --------------------------- model glue (orchestration) ---------------------

def vss_block(x, p):
    """LN -> SS2D -> residual (DropPath == identity at eval); 4 pallas_calls."""
    sp = p['ss2d']
    xc, z = ln_inproj_dwconv(x, p['ln_g'], p['ln_b'],
                             sp['in_proj_w'], sp['in_proj_b'],
                             sp['conv_w'], sp['conv_b'])
    u, dt_f, dt_b, bc_f, bc_b = proj_streams(xc, sp['proj_w'])
    y = selective_scan4(u, dt_f, dt_b, bc_f, bc_b,
                        sp['A'], sp['dt_bias'], sp['Ds'])
    return ss2d_tail(y, z, x, sp['out_norm_g'], sp['out_norm_b'],
                     sp['out_proj_w'], sp['out_proj_b'])


def patch_embed(x_nchw, p):
    B, Cin, H, W = x_nchw.shape
    x = x_nchw.transpose(0, 2, 3, 1)
    x = x.reshape(B, H // 4, 4, W // 4, 4, Cin).transpose(0, 1, 3, 2, 4, 5)
    x = x.reshape(B * (H // 4) * (W // 4), 16 * Cin)
    x = linear_ln(x, p['w'], p['b'], p['norm_g'], p['norm_b'], parts=B)
    E = p['w'].shape[1]
    return x.reshape(B, H // 4, W // 4, E)


def patch_merging(x, p):
    B, H, W, C = x.shape
    x0 = x[:, 0::2, 0::2]
    x1 = x[:, 1::2, 0::2]
    x2 = x[:, 0::2, 1::2]
    x3 = x[:, 1::2, 1::2]
    xc = jnp.concatenate([x0, x1, x2, x3], axis=-1).reshape(-1, 4 * C)
    xr = ln_linear(xc, p['norm_g'], p['norm_b'], p['red_w'], p['red_b'], parts=B)
    return xr.reshape(B, H // 2, W // 2, 2 * C)


def patch_expand(x, p, scale):
    B, H, W, C = x.shape
    c_out = C // scale
    xe = expand_ln(x.reshape(-1, C), p['exp_w'], p['exp_b'],
                   p['norm_g'], p['norm_b'], parts=B)
    xe = xe.reshape(B, H, W, scale, scale, c_out).transpose(0, 1, 3, 2, 4, 5)
    return xe.reshape(B, H * scale, W * scale, c_out)


def final_head(x, p_up, w_head, b_head):
    B, H, W, C = x.shape
    out = final_expand_head(x.reshape(-1, C), p_up['exp_w'], p_up['exp_b'],
                            p_up['norm_g'], p_up['norm_b'], w_head, b_head,
                            parts=B)
    nc = out.shape[-1] // 16
    out = out.reshape(B, H, W, 4, 4, nc).transpose(0, 1, 3, 2, 4, 5)
    return out.reshape(B, H * 4, W * 4, nc)


def vssm_forward(x_nchw, params):
    x = patch_embed(x_nchw, params['patch_embed'])
    skips = []
    for layer in params['layers']:
        skips.append(x)
        for blk in layer['blocks']:
            x = vss_block(x, blk)
        if layer['downsample'] is not None:
            x = patch_merging(x, layer['downsample'])
    for i, layer in enumerate(params['layers_up']):
        if i > 0:
            x = x + skips[-i]
        if layer['upsample'] is not None:
            x = patch_expand(x, layer['upsample'], 2)
        for blk in layer['blocks']:
            x = vss_block(x, blk)
    logits = final_head(x, params['final_up'],
                        params['final_head_w'], params['final_head_b'])
    return logits.transpose(0, 3, 1, 2)                      # back to NCHW


def vmunetg_forward(x_nchw, params, num_classes=3):
    if x_nchw.shape[1] == 1:
        x_nchw = jnp.repeat(x_nchw, 3, axis=1)
    logits = vssm_forward(x_nchw, params)
    if num_classes == 1:
        return jax.nn.sigmoid(logits)
    return logits


# --------------------------- deterministic parameter init -------------------

def init_params(key, in_chans=3, num_classes=3,
                dims=(16, 32, 64, 128), depths=(2, 2, 9, 2),
                depths_decoder=(2, 9, 2, 2), d_state=8):
    key_iter = iter(jax.random.split(key, 2048))

    def nk():
        return next(key_iter)

    def w_init(shape, scale=0.02):
        return scale * jax.random.normal(nk(), shape, jnp.float32)

    def ln_init(c):
        return jnp.ones((1, c), jnp.float32), jnp.zeros((1, c), jnp.float32)

    def ss2d_params(c):
        di = 2 * c
        r = max(2, math.ceil(c / 16))
        n = d_state
        a_log = jnp.log(jnp.broadcast_to(
            jnp.arange(1, n + 1, dtype=jnp.float32)[None, :, None], (4, n, di)))
        ong, onb = ln_init(di)
        return dict(
            in_proj_w=w_init((c, 2 * di)),
            in_proj_b=jnp.zeros((1, 2 * di), jnp.float32),
            conv_w=w_init((3, 3, di)),
            conv_b=jnp.zeros((1, di), jnp.float32),
            x_proj_w=w_init((4, di, r + 2 * n)),
            dt_proj_w=w_init((4, r, di)),
            dt_bias=jnp.full((4, 1, di), math.log(math.expm1(0.01)), jnp.float32),
            A_log=a_log,
            Ds=jnp.ones((4, 1, di), jnp.float32),
            out_norm_g=ong, out_norm_b=onb,
            out_proj_w=w_init((di, c)),
            out_proj_b=jnp.zeros((1, c), jnp.float32),
        )

    def block_params(c):
        g, b = ln_init(c)
        return dict(ln_g=g, ln_b=b, ss2d=ss2d_params(c))

    params = {}
    e = dims[0]
    peg, peb = ln_init(e)
    params['patch_embed'] = dict(w=w_init((16 * in_chans, e)),
                                 b=jnp.zeros((1, e), jnp.float32),
                                 norm_g=peg, norm_b=peb)
    layers = []
    for i, c in enumerate(dims):
        blocks = [block_params(c) for _ in range(depths[i])]
        if i < len(dims) - 1:
            ng, nb = ln_init(4 * c)
            down = dict(norm_g=ng, norm_b=nb,
                        red_w=w_init((4 * c, 2 * c)),
                        red_b=jnp.zeros((1, 2 * c), jnp.float32))
        else:
            down = None
        layers.append(dict(blocks=blocks, downsample=down))
    params['layers'] = layers

    dims_dec = dims[::-1]
    layers_up = []
    for i, c in enumerate(dims_dec):
        if i == 0:
            up = None
        else:
            cin = dims_dec[i - 1]      # = 2 * c
            ng, nb = ln_init(cin // 2)
            up = dict(exp_w=w_init((cin, 2 * cin)),
                      exp_b=jnp.zeros((1, 2 * cin), jnp.float32),
                      norm_g=ng, norm_b=nb)
        blocks = [block_params(c) for _ in range(depths_decoder[i])]
        layers_up.append(dict(upsample=up, blocks=blocks))
    params['layers_up'] = layers_up

    c0 = dims[0]
    fg, fb = ln_init(c0 // 4)
    params['final_up'] = dict(exp_w=w_init((c0, 4 * c0)),
                              exp_b=jnp.zeros((1, 4 * c0), jnp.float32),
                              norm_g=fg, norm_b=fb)
    params['final_conv_w'] = w_init((c0 // 4, num_classes))
    params['final_conv_b'] = jnp.zeros((1, num_classes), jnp.float32)
    return params


def prepare_params(params):
    """Fold x_proj + dt_proj into one fused per-stream weight (no dt bias folded
    -- the delta_bias lives only in the scan), pre-negate -exp(A_log), build the
    block-diagonal final head, and pre-cast all matmul weights to bf16."""
    bf = lambda a: a.astype(jnp.bfloat16)

    def fuse_block(blk):
        sp = blk['ss2d']
        xw, dtw = sp['x_proj_w'], sp['dt_proj_w']
        R = dtw.shape[1]
        pw = []
        for s in range(2):                      # stream 0: row-major, 1: col-major
            cols = [xw[s][:, :R] @ dtw[s],      # dt (forward dir s)
                    xw[s + 2][:, :R] @ dtw[s + 2],   # dt (backward dir s+2)
                    xw[s][:, R:],               # [B | C] forward
                    xw[s + 2][:, R:]]           # [B | C] backward
            pw.append(jnp.concatenate(cols, axis=1))
        new_sp = dict(
            in_proj_w=bf(sp['in_proj_w']), in_proj_b=sp['in_proj_b'],
            conv_w=sp['conv_w'], conv_b=sp['conv_b'],
            proj_w=bf(jnp.stack(pw, axis=0)),   # (2, Di, 2Di + 4N)
            A=-jnp.exp(sp['A_log']),            # (4, N, Di)
            dt_bias=sp['dt_bias'], Ds=sp['Ds'],
            out_norm_g=sp['out_norm_g'], out_norm_b=sp['out_norm_b'],
            out_proj_w=bf(sp['out_proj_w']), out_proj_b=sp['out_proj_b'])
        return dict(ln_g=blk['ln_g'], ln_b=blk['ln_b'], ss2d=new_sp)

    out = {}
    pe = params['patch_embed']
    out['patch_embed'] = dict(pe, w=bf(pe['w']))

    layers = []
    for layer in params['layers']:
        down = layer['downsample']
        if down is not None:
            down = dict(down, red_w=bf(down['red_w']))
        layers.append(dict(blocks=[fuse_block(b) for b in layer['blocks']],
                           downsample=down))
    out['layers'] = layers

    layers_up = []
    for layer in params['layers_up']:
        up = layer['upsample']
        if up is not None:
            up = dict(up, exp_w=bf(up['exp_w']))
        layers_up.append(dict(blocks=[fuse_block(b) for b in layer['blocks']],
                              upsample=up))
    out['layers_up'] = layers_up

    fu = params['final_up']
    out['final_up'] = dict(fu, exp_w=bf(fu['exp_w']))
    # block-diagonal (16 groups) fused 1x1-conv head -> lane-dense 48-wide output
    out['final_head_w'] = bf(jnp.kron(jnp.eye(16, dtype=jnp.float32),
                                      params['final_conv_w']))
    out['final_head_b'] = jnp.tile(params['final_conv_b'], (1, 16))
    return out


if __name__ == "__main__":
    key = jax.random.PRNGKey(0)
    pkey, xkey = jax.random.split(key)
    params = prepare_params(init_params(pkey, in_chans=3, num_classes=3))
    # NCHW input like the PyTorch module; spatial must be divisible by 32
    x = jax.random.normal(xkey, (2, 3, 32, 32), jnp.float32)
    out = vmunetg_forward(x, params, num_classes=3)
    out = jax.block_until_ready(out)
    assert out.shape == (2, 3, 32, 32), out.shape
    assert bool(jnp.all(jnp.isfinite(out)))
    print("KERNEL_OK")
</pallas_src>

<mosaic_0001>
module attributes {stable_mosaic.version = 11 : i64} {
  func.func @_matmul_ln_kernel(%arg0: i32, %arg1: memref<64x48xf32, #tpu.memory_space<vmem>>, %arg2: memref<48x16xbf16, #tpu.memory_space<vmem>>, %arg3: memref<1x16xf32, #tpu.memory_space<vmem>>, %arg4: memref<1x16xf32, #tpu.memory_space<vmem>>, %arg5: memref<1x16xf32, #tpu.memory_space<vmem>>, %arg6: memref<64x16xf32, #tpu.memory_space<vmem>>) attributes {dimension_semantics = [#tpu.dimension_semantics<parallel>], iteration_bounds = array<i64: 2>, scalar_prefetch = 0 : i64, scratch_operands = 0 : i64, tpu.core_type = #tpu.core_type<tc>, window_params = [{transform_indices = @transform_0, window_bounds = array<i64: 64, 48>}, {pipeline_mode = #tpu.pipeline_mode<synchronous>, transform_indices = @transform_1, window_bounds = array<i64: 48, 16>}, {pipeline_mode = #tpu.pipeline_mode<synchronous>, transform_indices = @transform_2, window_bounds = array<i64: 1, 16>}, {pipeline_mode = #tpu.pipeline_mode<synchronous>, transform_indices = @transform_3, window_bounds = array<i64: 1, 16>}, {pipeline_mode = #tpu.pipeline_mode<synchronous>, transform_indices = @transform_4, window_bounds = array<i64: 1, 16>}, {transform_indices = @transform_5, window_bounds = array<i64: 64, 16>}]} {
    %c0 = arith.constant 0 : index
    %c0_0 = arith.constant 0 : index
    %0 = vector.load %arg1[%c0, %c0_0] : memref<64x48xf32, #tpu.memory_space<vmem>>, vector<64x48xf32>
    %1 = arith.truncf %0 : vector<64x48xf32> to vector<64x48xbf16>
    %c0_1 = arith.constant 0 : index
    %c0_2 = arith.constant 0 : index
    %2 = vector.load %arg2[%c0_1, %c0_2] : memref<48x16xbf16, #tpu.memory_space<vmem>>, vector<48x16xbf16>
    %cst = arith.constant dense<0.000000e+00> : vector<64x16xf32>
    %3 = tpu.matmul %1, %2, %cst {dimension_numbers = #tpu.dot_dimension_numbers<[1], [0], [0], [1], [0, 0, 1, 1], [], []>} : vector<64x48xbf16>, vector<48x16xbf16>, vector<64x16xf32> -> vector<64x16xf32>
    %c0_3 = arith.constant 0 : index
    %c0_4 = arith.constant 0 : index
    %4 = vector.load %arg3[%c0_3, %c0_4] : memref<1x16xf32, #tpu.memory_space<vmem>>, vector<1x16xf32>
    %5 = vector.broadcast %4 : vector<1x16xf32> to vector<64x16xf32>
    %6 = arith.addf %3, %5 : vector<64x16xf32>
    %cst_5 = arith.constant dense<0.000000e+00> : vector<64xf32>
    %7 = vector.multi_reduction <add>, %6, %cst_5 [1] : vector<64x16xf32> to vector<64xf32>
    %8 = vector.shape_cast %7 : vector<64xf32> to vector<64x1xf32>
    %cst_6 = arith.constant 1.600000e+01 : f32
    %9 = vector.broadcast %cst_6 : f32 to vector<64x1xf32>
    %10 = arith.divf %8, %9 : vector<64x1xf32>
    %11 = vector.broadcast %10 : vector<64x1xf32> to vector<64x16xf32>
    %12 = arith.subf %6, %11 : vector<64x16xf32>
    %13 = arith.mulf %12, %12 : vector<64x16xf32>
    %cst_7 = arith.constant dense<0.000000e+00> : vector<64xf32>
    %14 = vector.multi_reduction <add>, %13, %cst_7 [1] : vector<64x16xf32> to vector<64xf32>
    %15 = vector.shape_cast %14 : vector<64xf32> to vector<64x1xf32>
    %cst_8 = arith.constant 1.600000e+01 : f32
    %16 = vector.broadcast %cst_8 : f32 to vector<64x1xf32>
    %17 = arith.divf %15, %16 : vector<64x1xf32>
    %cst_9 = arith.constant 9.99999974E-6 : f32
    %18 = vector.broadcast %cst_9 : f32 to vector<64x1xf32>
    %19 = arith.addf %17, %18 : vector<64x1xf32>
    %20 = math.rsqrt %19 : vector<64x1xf32>
    %21 = vector.broadcast %20 : vector<64x1xf32> to vector<64x16xf32>
    %22 = arith.mulf %12, %21 : vector<64x16xf32>
    %c0_10 = arith.constant 0 : index
    %c0_11 = arith.constant 0 : index
    %23 = vector.load %arg4[%c0_10, %c0_11] : memref<1x16xf32, #tpu.memory_space<vmem>>, vector<1x16xf32>
    %24 = vector.broadcast %23 : vector<1x16xf32> to vector<64x16xf32>
    %25 = arith.mulf %22, %24 : vector<64x16xf32>
    %c0_12 = arith.constant 0 : index
    %c0_13 = arith.constant 0 : index
    %26 = vector.load %arg5[%c0_12, %c0_13] : memref<1x16xf32, #tpu.memory_space<vmem>>, vector<1x16xf32>
    %27 = vector.broadcast %26 : vector<1x16xf32> to vector<64x16xf32>
    %28 = arith.addf %25, %27 : vector<64x16xf32>
    %c0_14 = arith.constant 0 : index
    %c0_15 = arith.constant 0 : index
    %29 = vector.load %arg6[%c0_14, %c0_15] : memref<64x16xf32, #tpu.memory_space<vmem>>, vector<64x16xf32>
    tpu.vector_store %arg6[%c0_14, %c0_15], %28 {strides = array<i32>} : memref<64x16xf32, #tpu.memory_space<vmem>>, vector<64x16xf32>,
    return
  }
  func.func @transform_0(%arg0: i32) -> (i32, i32) {
    %c0_i32 = arith.constant 0 : i32
    %c0_i32_0 = arith.constant 0 : i32
    return %arg0, %c0_i32 : i32, i32
  }
  func.func @transform_1(%arg0: i32) -> (i32, i32) {
    %c0_i32 = arith.constant 0 : i32
    %c0_i32_0 = arith.constant 0 : i32
    %c0_i32_1 = arith.constant 0 : i32
    return %c0_i32, %c0_i32_0 : i32, i32
  }
  func.func @transform_2(%arg0: i32) -> (i32, i32) {
    %c0_i32 = arith.constant 0 : i32
    %c0_i32_0 = arith.constant 0 : i32
    %c0_i32_1 = arith.constant 0 : i32
    return %c0_i32, %c0_i32_0 : i32, i32
  }
  func.func @transform_3(%arg0: i32) -> (i32, i32) {
    %c0_i32 = arith.constant 0 : i32
    %c0_i32_0 = arith.constant 0 : i32
    %c0_i32_1 = arith.constant 0 : i32
    return %c0_i32, %c0_i32_0 : i32, i32
  }
  func.func @transform_4(%arg0: i32) -> (i32, i32) {
    %c0_i32 = arith.constant 0 : i32
    %c0_i32_0 = arith.constant 0 : i32
    %c0_i32_1 = arith.constant 0 : i32
    return %c0_i32, %c0_i32_0 : i32, i32
  }
  func.func @transform_5(%arg0: i32) -> (i32, i32) {
    %c0_i32 = arith.constant 0 : i32
    %c0_i32_0 = arith.constant 0 : i32
    return %arg0, %c0_i32 : i32, i32
  }
}

</mosaic_0001>

<llo_original>
// kernel: linear_ln.1
$region0: #{linear_ln.1}
  #allocation0 [shape = 'u32[]', space=smem, size = 0x4, offset = 0x4, fixed_abs, tag = 'smem constant byte address 0x4 - core index']
  #allocation1 [shape = 'u32[144,128]{1,0:T(1,128)}', space=vmem, size = 0x12000, scoped, tag = 'internal scratch']
  %s0 = inlined_call_operand.vmem [shape: f32[128,48], index: 0, kind: input, shape index: {}]
  %s1 = inlined_call_operand.vmem [shape: bf16[48,16], index: 1, kind: input, shape index: {}]
  %s2 = inlined_call_operand.vmem [shape: f32[1,16], index: 2, kind: input, shape index: {}]
  %s3 = inlined_call_operand.vmem [shape: f32[1,16], index: 3, kind: input, shape index: {}]
  %s4 = inlined_call_operand.vmem [shape: f32[1,16], index: 4, kind: input, shape index: {}]
  %s5 = inlined_call_operand.vmem [shape: f32[128,16], index: 5, kind: output, shape index: {}]
  %s6 = sld [smem:[#allocation0]]
  $region53: #{linear_ln.1} parent=0
    _
  %s8 = ssub.s32 1, %s6
  %s9 = scalar_select 0, %s8, %s6
  loop: start=0, step=1, limit=4
  $region2: #{linear_ln.1} parent=0 // loop_pre_header
    _
  $region3: #{linear_ln.1} parent=0 // loop_header
    %s11 = sphi 0, %s15
    %p12 = scmp.ge.s32.totalorder %s11, 4
    %s21 = sphi 0, %s23
    %s24 = sphi 0, %s21
    %s25 = sphi 0, %s24
    %s41 = sphi 0, %s25
    %s45 = sphi 0, %s45
    %s47 = sphi 0, %s45
    %s48 = sphi 0, %s47
    %s62 = sphi 0, %s48
    %s66 = sphi 0, %s66
    %s68 = sphi 0, %s66
    %s69 = sphi 0, %s68
    %s83 = sphi 0, %s69
    %s87 = sphi 0, %s87
    %s89 = sphi 0, %s87
    %s90 = sphi 0, %s89
    %s104 = sphi 0, %s90
    %s108 = sphi 0, %s108
    %s110 = sphi 0, %s108
    %s111 = sphi 0, %s110
    %s125 = sphi 0, %s111
    %s131 = sphi 0, %s133
    %s134 = sphi 0, %s131
    %s135 = sphi 0, %s134
    %s151 = sphi 0, %s135
  $region4: #{linear_ln.1} parent=0 // loop_header_branch
    %14 = sbr.rel (%p12) target = $region8
  $region5: #{linear_ln.1} parent=0 // loop_body
    %s16 = ssub.s32 %s11, 1
    %s17 = ssub.s32 %s11, 2
    %s18 = sadd.s32 %s11, 1
    %s19 = ssub.s32 %s11, %s18
    %p20 = scmp.eq.s32.totalorder %s19, 0
    %s22 = sadd.s32 %s21, 1
    %s23 = scalar_select %p20, %s21, %s22
    %p26 = pneg %p20
    %p27 = scmp.eq.s32.totalorder %s11, 1
    %p28 = por %p26, %p27
    %p29 = scmp.ne.s32.totalorder %s21, %s24
    %p30 = scmp.eq.s32.totalorder %s11, 0
    %p31 = por %p29, %p30
    %p32 = scmp.ne.s32.totalorder %s21, %s24
    %p33 = scmp.eq.s32.totalorder %s16, 1
    %p34 = por %p32, %p33
    %p35 = scmp.ne.s32.totalorder %s24, %s25
    %p36 = scmp.eq.s32.totalorder %s16, 0
    %p37 = por %p35, %p36
    %p38 = scmp.ne.s32.totalorder %s24, %s25
    %p39 = scmp.eq.s32.totalorder %s17, 1
    %p40 = por %p38, %p39
    %p42 = scmp.ne.s32.totalorder %s25, %s41
    %p43 = scmp.eq.s32.totalorder %s17, 0
    %p44 = por %p42, %p43
    %s46 = sadd.s32 %s45, 1
    %p49 = scmp.eq.s32.totalorder %s11, 1
    %p50 = scmp.ne.s32.totalorder %s45, %s47
    %p51 = scmp.eq.s32.totalorder %s11, 0
    %p52 = por %p50, %p51
    %p53 = scmp.ne.s32.totalorder %s45, %s47
    %p54 = scmp.eq.s32.totalorder %s16, 1
    %p55 = por %p53, %p54
    %p56 = scmp.ne.s32.totalorder %s47, %s48
    %p57 = scmp.eq.s32.totalorder %s16, 0
    %p58 = por %p56, %p57
    %p59 = scmp.ne.s32.totalorder %s47, %s48
    %p60 = scmp.eq.s32.totalorder %s17, 1
    %p61 = por %p59, %p60
    %p63 = scmp.ne.s32.totalorder %s48, %s62
    %p64 = scmp.eq.s32.totalorder %s17, 0
    %p65 = por %p63, %p64
    %s67 = sadd.s32 %s66, 1
    %p70 = scmp.eq.s32.totalorder %s11, 1
    %p71 = scmp.ne.s32.totalorder %s66, %s68
    %p72 = scmp.eq.s32.totalorder %s11, 0
    %p73 = por %p71, %p72
    %p74 = scmp.ne.s32.totalorder %s66, %s68
    %p75 = scmp.eq.s32.totalorder %s16, 1
    %p76 = por %p74, %p75
    %p77 = scmp.ne.s32.totalorder %s68, %s69
    %p78 = scmp.eq.s32.totalorder %s16, 0
    %p79 = por %p77, %p78
    %p80 = scmp.ne.s32.totalorder %s68, %s69
    %p81 = scmp.eq.s32.totalorder %s17, 1
    %p82 = por %p80, %p81
    %p84 = scmp.ne.s32.totalorder %s69, %s83
    %p85 = scmp.eq.s32.totalorder %s17, 0
    %p86 = por %p84, %p85
    %s88 = sadd.s32 %s87, 1
    %p91 = scmp.eq.s32.totalorder %s11, 1
    %p92 = scmp.ne.s32.totalorder %s87, %s89
    %p93 = scmp.eq.s32.totalorder %s11, 0
    %p94 = por %p92, %p93
    %p95 = scmp.ne.s32.totalorder %s87, %s89
    %p96 = scmp.eq.s32.totalorder %s16, 1
    %p97 = por %p95, %p96
    %p98 = scmp.ne.s32.totalorder %s89, %s90
    %p99 = scmp.eq.s32.totalorder %s16, 0
    %p100 = por %p98, %p99
    %p101 = scmp.ne.s32.totalorder %s89, %s90
    %p102 = scmp.eq.s32.totalorder %s17, 1
    %p103 = por %p101, %p102
    %p105 = scmp.ne.s32.totalorder %s90, %s104
    %p106 = scmp.eq.s32.totalorder %s17, 0
    %p107 = por %p105, %p106
    %s109 = sadd.s32 %s108, 1
    %p112 = scmp.eq.s32.totalorder %s11, 1
    %p113 = scmp.ne.s32.totalorder %s108, %s110
    %p114 = scmp.eq.s32.totalorder %s11, 0
    %p115 = por %p113, %p114
    %p116 = scmp.ne.s32.totalorder %s108, %s110
    %p117 = scmp.eq.s32.totalorder %s16, 1
    %p118 = por %p116, %p117
    %p119 = scmp.ne.s32.totalorder %s110, %s111
    %p120 = scmp.eq.s32.totalorder %s16, 0
    %p121 = por %p119, %p120
    %p122 = scmp.ne.s32.totalorder %s110, %s111
    %p123 = scmp.eq.s32.totalorder %s17, 1
    %p124 = por %p122, %p123
    %p126 = scmp.ne.s32.totalorder %s111, %s125
    %p127 = scmp.eq.s32.totalorder %s17, 0
    %p128 = por %p126, %p127
    %s129 = ssub.s32 %s11, %s18
    %p130 = scmp.eq.s32.totalorder %s129, 0
    %s132 = sadd.s32 %s131, 1
    %s133 = scalar_select %p130, %s131, %s132
    %p136 = pneg %p130
    %p137 = scmp.eq.s32.totalorder %s11, 1
    %p138 = por %p136, %p137
    %p139 = scmp.ne.s32.totalorder %s131, %s134
    %p140 = scmp.eq.s32.totalorder %s11, 0
    %p141 = por %p139, %p140
    %p142 = scmp.ne.s32.totalorder %s131, %s134
    %p143 = scmp.eq.s32.totalorder %s16, 1
    %p144 = por %p142, %p143
    %p145 = scmp.ne.s32.totalorder %s134, %s135
    %p146 = scmp.eq.s32.totalorder %s16, 0
    %p147 = por %p145, %p146
    %p148 = scmp.ne.s32.totalorder %s134, %s135
    %p149 = scmp.eq.s32.totalorder %s17, 1
    %p150 = por %p148, %p149
    %p152 = scmp.ne.s32.totalorder %s135, %s151
    %p153 = scmp.eq.s32.totalorder %s17, 0
    %p154 = por %p152, %p153
    %p155 = scmp.le.s32.totalorder 1, %s11
    %p156 = scmp.lt.s32.totalorder %s11, 3
    %p157 = pnand %p155, %p156
    %p158 = pneg %p157
    // Predicated region
    $region9: #{linear_ln.1} parent=5 // pred_check
      _
    $region10: #{linear_ln.1} parent=5 // pred_check_branch
      %160 = sbr.rel (%p157) target = $region12
    $region11: #{linear_ln.1} parent=5 // pred_region
      %s161 = ssub.s32 %s11, 1
      // Predicated region
      $region13: #{linear_ln.1} parent=11 // pred_check
        %p162 = pneg %p58
      $region14: #{linear_ln.1} parent=11 // pred_check_branch
        %164 = sbr.rel (%p162) target = $region16
      $region15: #{linear_ln.1} parent=11 // pred_region
        _
      $region16: #{linear_ln.1} parent=11 // pred_fallthru
        _
      // Predicated region
      $region17: #{linear_ln.1} parent=11 // pred_check
        %p165 = pneg %p79
      $region18: #{linear_ln.1} parent=11 // pred_check_branch
        %167 = sbr.rel (%p165) target = $region20
      $region19: #{linear_ln.1} parent=11 // pred_region
        _
      $region20: #{linear_ln.1} parent=11 // pred_fallthru
        _
      // Predicated region
      $region21: #{linear_ln.1} parent=11 // pred_check
        %p168 = pneg %p100
      $region22: #{linear_ln.1} parent=11 // pred_check_branch
        %170 = sbr.rel (%p168) target = $region24
      $region23: #{linear_ln.1} parent=11 // pred_region
        _
      $region24: #{linear_ln.1} parent=11 // pred_fallthru
        _
      // Predicated region
      $region25: #{linear_ln.1} parent=11 // pred_check
        %p171 = pneg %p121
      $region26: #{linear_ln.1} parent=11 // pred_check_branch
        %173 = sbr.rel (%p171) target = $region28
      $region27: #{linear_ln.1} parent=11 // pred_region
        _
      $region28: #{linear_ln.1} parent=11 // pred_fallthru
        _
    $region12: #{linear_ln.1} parent=5 // pred_fallthru
      _
    %p174 = scmp.lt.s32.totalorder %s11, 2
    // Predicated region
    $region29: #{linear_ln.1} parent=5 // pred_check
      %p175 = pneg %p174
    $region30: #{linear_ln.1} parent=5 // pred_check_branch
      %177 = sbr.rel (%p175) target = $region32
    $region31: #{linear_ln.1} parent=5 // pred_region
      // Predicated region
      $region33: #{linear_ln.1} parent=31 // pred_check
        %p178 = pneg %p31
      $region34: #{linear_ln.1} parent=31 // pred_check_branch
        %180 = sbr.rel (%p178) target = $region36
      $region35: #{linear_ln.1} parent=31 // pred_region
        %s181 = smul.u32 8, %s11
        %p182 = scmp.lt.s32.totalorder %s181, 15
        %s183 = scalar_select %p182, %s181, 15
        %s184 = smul.addr %s183, 8
        %s185 = scalar_lea.vmem %s0, %s184
        %s186 = smul.u32 8, %s11
      $region36: #{linear_ln.1} parent=31 // pred_fallthru
        _
    $region32: #{linear_ln.1} parent=5 // pred_fallthru
      _
    %p187 = scmp.le.s32.totalorder 1, %s11
    %p188 = scmp.lt.s32.totalorder %s11, 3
    %p189 = pnand %p187, %p188
    %p190 = pneg %p189
    // Predicated region
    $region37: #{linear_ln.1} parent=5 // pred_check
      _
    $region38: #{linear_ln.1} parent=5 // pred_check_branch
      %192 = sbr.rel (%p189) target = $region40
    $region39: #{linear_ln.1} parent=5 // pred_region
      %s193 = ssub.s32 %s11, 1
      %s194 = smul.u32 8, %s16
      %p195 = scmp.lt.s32.totalorder %s194, 15
      %s196 = scalar_select %p195, %s194, 15
      %s197 = smul.addr %s196, 8
      %s198 = scalar_lea.vmem %s0, %s197
      %p199 = pneg %p37
      %p200 = pneg %p34
      %p201 = pneg %p58
      %p202 = pneg %p55
      %p203 = pneg %p79
      %p204 = pneg %p76
      %p205 = pneg %p100
      %p206 = pneg %p97
      %p207 = pneg %p121
      %p208 = pneg %p118
      %p209 = pneg %p147
      %p210 = pneg %p144
      %s211 = smul.u32 8, %s16
      %p212 = scmp.lt.s32.totalorder %s211, 15
      %s213 = scalar_select %p212, %s211, 15
      %s214 = smul.addr %s213, 8
      %s215 = scalar_lea.vmem %s5, %s214
      %s216 = smul.u32 8, %s16
      %p217 = scmp.lt.s32.totalorder %s216, 15
      %s218 = scalar_select %p217, %s216, 15
      %s219 = smul.addr %s218, 8
      %s220 = scalar_lea.vmem %s0, %s219
      %s221 = smul.u32 8, %s16
      %s222 = smul.u32 8, %s16
      %p223 = scmp.lt.s32.totalorder %s222, 15
      %s224 = scalar_select %p223, %s222, 15
      %s225 = smul.addr %s224, 8
      %s226 = scalar_lea.vmem %s5, %s225
      %s227 = smul.u32 8, %s16
      %v229 = vld [vmem:[%s220] sm:$0xff]
      %v230 = vld [vmem:[%s220 + $0x8] sm:$0xff]
      %v231 = vld [vmem:[%s220 + $0x10] sm:$0xff]
      %v232 = vld [vmem:[%s220 + $0x18] sm:$0xff]
      %v233 = vld [vmem:[%s220 + $0x20] sm:$0xff]
      %v234 = vld [vmem:[%s220 + $0x28] sm:$0xff]
      %v235 = vld [vmem:[%s220 + $0x30] sm:$0xff]
      %v236 = vld [vmem:[%s220 + $0x38] sm:$0xff]
      %v237 = vpack.c.bf16 %v230, %v229
      %v238 = vpack.c.bf16 %v232, %v231
      %v239 = vpack.c.bf16 %v234, %v233
      %v240 = vpack.c.bf16 %v236, %v235
      %v241 = vld [vmem:[%s1] sm:$0xf]
      %v242 = vld [vmem:[%s1 + $0x4] sm:$0xf]
      %v243 = vld [vmem:[%s1 + $0x8] sm:$0xf]
      %v244 = vld [vmem:[%s1 + $0xc] sm:$0xf]
      %v245 = vld [vmem:[%s1 + $0x10] sm:$0xf]
      %v246 = vld [vmem:[%s1 + $0x14] sm:$0xf]
      %v247 = vld [vmem:[%s2] sm:$0x1]
      %v249 = vlaneseq
      %v250 = vshrl.u32 %v249, 7
      %v251 = vsub.s32 0, %v250
      %v252 = vrot.slane %v247, %v251
      %v260 = vunpack.c.l.b16 %v241
      %v261 = vunpack.c.l.b16 %v242
      %v262 = vunpack.c.l.b16 %v243
      %v263 = vunpack.c.l.b16 %v244
      %v264 = vunpack.c.l.b16 %v245
      %v265 = vunpack.c.l.b16 %v246
      %v266 = vpack.c.b16 %v261, %v260
      %v267 = vpack.c.b16 %v263, %v262
      %v268 = vpack.c.b16 %v265, %v264
      %vm272 = vcmask 392192
      %v274 = vsel %vm272, %v237, 0
      %v277 = vsel %vm272, %v238, 0
      %v280 = vsel %vm272, %v239, 0
      %v283 = vsel %vm272, %v240, 0
      %285 = vmatprep.subr.bf16.mxu0 0
      %286 = vmatpush1.bf16.msra.mxu0 0
      %287 = vmatprep.subr.bf16.mxu0 0
      %288 = vmatpush1.bf16.msra.mxu0 0
      %289 = vmatprep.subr.bf16.mxu0 0
      %290 = vmatpush1.bf16.msra.mxu0 0
      %291 = vmatprep.subr.bf16.mxu0 0
      %292 = vmatpush1.bf16.msra.mxu0 0
      %293 = vmatprep.subr.bf16.mxu0 0
      %294 = vmatpush1.bf16.msra.mxu0 0
      %295 = vmatprep.subr.bf16.mxu0 0
      %296 = vmatpush1.bf16.msra.mxu0 %v268
      %297 = vmatprep.subr.bf16.mxu0 0
      %298 = vmatpush1.bf16.msra.mxu0 %v267
      %299 = vmatprep.subr.bf16.mxu0 0
      %300 = vmatpush1.bf16.msra.mxu0 %v266
      %301 = vmatprep.subr.bf16.mxu0 0
      %302 = vmatpush2.bf16.msra.mxu0 0
      %303 = vmatprep.subr.bf16.mxu0 0
      %304 = vmatpush2.bf16.msra.mxu0 0
      %305 = vmatprep.subr.bf16.mxu0 0
      %306 = vmatpush2.bf16.msra.mxu0 0
      %307 = vmatprep.subr.bf16.mxu0 0
      %308 = vmatpush2.bf16.msra.mxu0 0
      %309 = vmatprep.subr.bf16.mxu0 0
      %310 = vmatpush2.bf16.msra.mxu0 0
      %311 = vmatprep.subr.bf16.mxu0 0
      %312 = vmatpush2.bf16.msra.mxu0 0
      %313 = vmatprep.subr.bf16.mxu0 0
      %314 = vmatpush2.bf16.msra.mxu0 0
      %315 = vmatprep.subr.bf16.mxu0 0
      %316 = vmatpush2.bf16.msra.mxu0 0
      %317 = vmatprep.mubr.bf16.mxu0 0
      %318 = vmatmul.mubr.bf16.gmra.mxu0 %v274
      %v319 = vpop.f32.mrf.mxu0
      %v320 = vadd.f32 %v252, %v319
      %v321 = vpop.f32.mrf.mxu0
      %v322 = vpop.f32.mrf.mxu0
      %v323 = vadd.f32 %v252, %v322
      %v324 = vpop.f32.mrf.mxu0
      %325 = vmatprep.mubr.bf16.mxu0 0
      %326 = vmatmul.mubr.bf16.gmra.mxu0 %v277
      %v327 = vpop.f32.mrf.mxu0
      %v328 = vadd.f32 %v252, %v327
      %v329 = vpop.f32.mrf.mxu0
      %v330 = vpop.f32.mrf.mxu0
      %v331 = vadd.f32 %v252, %v330
      %v332 = vpop.f32.mrf.mxu0
      %333 = vmatprep.mubr.bf16.mxu0 0
      %334 = vmatmul.mubr.bf16.gmra.mxu0 %v280
      %v335 = vpop.f32.mrf.mxu0
      %v336 = vadd.f32 %v252, %v335
      %v337 = vpop.f32.mrf.mxu0
      %v338 = vpop.f32.mrf.mxu0
      %v339 = vadd.f32 %v252, %v338
      %v340 = vpop.f32.mrf.mxu0
      %341 = vmatprep.mubr.bf16.mxu0 0
      %342 = vmatmul.mubr.bf16.gmra.mxu0 %v283
      %v343 = vpop.f32.mrf.mxu0
      %v344 = vadd.f32 %v252, %v343
      %v345 = vpop.f32.mrf.mxu0
      %v346 = vpop.f32.mrf.mxu0
      %v347 = vadd.f32 %v252, %v346
      %v348 = vpop.f32.mrf.mxu0
      %349 = vdwg.mxu0
      %vm350 = vcmask 130048
      %v351 = vsel %vm350, %v320, 0.0
      %352 = vadd.xlane.f32.xlu0 %v351
      %v353 = vpop.xlane.xlu0 %352
      %v354 = vsel %vm350, %v323, 0.0
      %355 = vadd.xlane.f32.xlu0 %v354
      %v356 = vpop.xlane.xlu0 %355
      %v357 = vsel %vm350, %v328, 0.0
      %358 = vadd.xlane.f32.xlu0 %v357
      %v359 = vpop.xlane.xlu0 %358
      %v360 = vsel %vm350, %v331, 0.0
      %361 = vadd.xlane.f32.xlu0 %v360
      %v362 = vpop.xlane.xlu0 %361
      %v363 = vsel %vm350, %v336, 0.0
      %364 = vadd.xlane.f32.xlu0 %v363
      %v365 = vpop.xlane.xlu0 %364
      %v366 = vsel %vm350, %v339, 0.0
      %367 = vadd.xlane.f32.xlu0 %v366
      %v368 = vpop.xlane.xlu0 %367
      %v369 = vsel %vm350, %v344, 0.0
      %370 = vadd.xlane.f32.xlu0 %v369
      %v371 = vpop.xlane.xlu0 %370
      %v372 = vsel %vm350, %v347, 0.0
      %373 = vadd.xlane.f32.xlu0 %v372
      %v374 = vpop.xlane.xlu0 %373
      %v375 = vrcp.pop 16.0
      %v376 = vmul.f32 %v353, %v375
      %v377 = vmul.f32 %v356, %v375
      %v378 = vmul.f32 %v359, %v375
      %v379 = vmul.f32 %v362, %v375
      %v380 = vmul.f32 %v365, %v375
      %v381 = vmul.f32 %v368, %v375
      %v382 = vmul.f32 %v371, %v375
      %v383 = vmul.f32 %v374, %v375
      %v384 = vsub.f32 %v320, %v376
      %v385 = vsub.f32 %v323, %v377
      %v386 = vsub.f32 %v328, %v378
      %v387 = vsub.f32 %v331, %v379
      %v388 = vsub.f32 %v336, %v380
      %v389 = vsub.f32 %v339, %v381
      %v390 = vsub.f32 %v344, %v382
      %v391 = vsub.f32 %v347, %v383
      %v392 = vmul.f32 %v384, %v384
      %v393 = vmul.f32 %v385, %v385
      %v394 = vmul.f32 %v386, %v386
      %v395 = vmul.f32 %v387, %v387
      %v396 = vmul.f32 %v388, %v388
      %v397 = vmul.f32 %v389, %v389
      %v398 = vmul.f32 %v390, %v390
      %v399 = vmul.f32 %v391, %v391
      %v400 = vsel %vm350, %v392, 0.0
      %401 = vadd.xlane.f32.xlu0 %v400
      %v402 = vpop.xlane.xlu0 %401
      %v403 = vsel %vm350, %v393, 0.0
      %404 = vadd.xlane.f32.xlu0 %v403
      %v405 = vpop.xlane.xlu0 %404
      %v406 = vsel %vm350, %v394, 0.0
      %407 = vadd.xlane.f32.xlu0 %v406
      %v408 = vpop.xlane.xlu0 %407
      %v409 = vsel %vm350, %v395, 0.0
      %410 = vadd.xlane.f32.xlu0 %v409
      %v411 = vpop.xlane.xlu0 %410
      %v412 = vsel %vm350, %v396, 0.0
      %413 = vadd.xlane.f32.xlu0 %v412
      %v414 = vpop.xlane.xlu0 %413
      %v415 = vsel %vm350, %v397, 0.0
      %416 = vadd.xlane.f32.xlu0 %v415
      %v417 = vpop.xlane.xlu0 %416
      %v418 = vsel %vm350, %v398, 0.0
      %419 = vadd.xlane.f32.xlu0 %v418
      %v420 = vpop.xlane.xlu0 %419
      %v421 = vsel %vm350, %v399, 0.0
      %422 = vadd.xlane.f32.xlu0 %v421
      %v423 = vpop.xlane.xlu0 %422
      %v424 = vmul.f32 %v402, %v375
      %v425 = vmul.f32 %v405, %v375
      %v426 = vmul.f32 %v408, %v375
      %v427 = vmul.f32 %v411, %v375
      %v428 = vmul.f32 %v414, %v375
      %v429 = vmul.f32 %v417, %v375
      %v430 = vmul.f32 %v420, %v375
      %v431 = vmul.f32 %v423, %v375
      %v432 = vadd.f32 %v424, 1e-05
      %v433 = vadd.f32 %v425, 1e-05
      %v434 = vadd.f32 %v426, 1e-05
      %v435 = vadd.f32 %v427, 1e-05
      %v436 = vadd.f32 %v428, 1e-05
      %v437 = vadd.f32 %v429, 1e-05
      %v438 = vadd.f32 %v430, 1e-05
      %v439 = vadd.f32 %v431, 1e-05
      %v440 = vrsqrt.pop %v432
      %v441 = vrsqrt.pop %v433
      %v442 = vrsqrt.pop %v434
      %v443 = vrsqrt.pop %v435
      %v444 = vrsqrt.pop %v436
      %v445 = vrsqrt.pop %v437
      %v446 = vrsqrt.pop %v438
      %v447 = vrsqrt.pop %v439
      %v448 = vmul.f32 %v384, %v440
      %v449 = vmul.f32 %v385, %v441
      %v450 = vmul.f32 %v386, %v442
      %v451 = vmul.f32 %v387, %v443
      %v452 = vmul.f32 %v388, %v444
      %v453 = vmul.f32 %v389, %v445
      %v454 = vmul.f32 %v390, %v446
      %v455 = vmul.f32 %v391, %v447
      %v456 = vld [vmem:[%s3] sm:$0x1]
      %v458 = vlaneseq
      %v459 = vshrl.u32 %v458, 7
      %v460 = vsub.s32 0, %v459
      %v461 = vrot.slane %v456, %v460
      %v463 = vmul.f32 %v448, %v461
      %v464 = vmul.f32 %v449, %v461
      %v465 = vmul.f32 %v450, %v461
      %v466 = vmul.f32 %v451, %v461
      %v467 = vmul.f32 %v452, %v461
      %v468 = vmul.f32 %v453, %v461
      %v469 = vmul.f32 %v454, %v461
      %v470 = vmul.f32 %v455, %v461
      %v471 = vld [vmem:[%s4] sm:$0x1]
      %v473 = vlaneseq
      %v474 = vshrl.u32 %v473, 7
      %v475 = vsub.s32 0, %v474
      %v476 = vrot.slane %v471, %v475
      %v478 = vadd.f32 %v463, %v476
      %v479 = vadd.f32 %v464, %v476
      %v480 = vadd.f32 %v465, %v476
      %v481 = vadd.f32 %v466, %v476
      %v482 = vadd.f32 %v467, %v476
      %v483 = vadd.f32 %v468, %v476
      %v484 = vadd.f32 %v469, %v476
      %v485 = vadd.f32 %v470, %v476
      %486 = vst.msk [vmem:[%s226] sm:$0xff] %vm350, %v478
      %487 = vst.msk [vmem:[%s226 + $0x8] sm:$0xff] %vm350, %v479
      %488 = vst.msk [vmem:[%s226 + $0x10] sm:$0xff] %vm350, %v480
      %489 = vst.msk [vmem:[%s226 + $0x18] sm:$0xff] %vm350, %v481
      %490 = vst.msk [vmem:[%s226 + $0x20] sm:$0xff] %vm350, %v482
      %491 = vst.msk [vmem:[%s226 + $0x28] sm:$0xff] %vm350, %v483
      %492 = vst.msk [vmem:[%s226 + $0x30] sm:$0xff] %vm350, %v484
      %493 = vst.msk [vmem:[%s226 + $0x38] sm:$0xff] %vm350, %v485
      %s494 = smul.u32 8, %s16
      %p495 = scmp.lt.s32.totalorder %s494, 15
      %s496 = scalar_select %p495, %s494, 15
      %s497 = smul.addr %s496, 8
      %s498 = scalar_lea.vmem %s5, %s497
      // Predicated region
      $region41: #{linear_ln.1} parent=39 // pred_check
        %p499 = pneg %p144
      $region42: #{linear_ln.1} parent=39 // pred_check_branch
        %501 = sbr.rel (%p499) target = $region44
      $region43: #{linear_ln.1} parent=39 // pred_region
        %s502 = smul.u32 8, %s16
      $region44: #{linear_ln.1} parent=39 // pred_fallthru
        _
    $region40: #{linear_ln.1} parent=5 // pred_fallthru
      _
    %p503 = scmp.le.s32.totalorder 2, %s11
    // Predicated region
    $region45: #{linear_ln.1} parent=5 // pred_check
      %p504 = pneg %p503
    $region46: #{linear_ln.1} parent=5 // pred_check_branch
      %506 = sbr.rel (%p504) target = $region48
    $region47: #{linear_ln.1} parent=5 // pred_region
      %s507 = ssub.s32 %s11, 2
      // Predicated region
      $region49: #{linear_ln.1} parent=47 // pred_check
        %p508 = pneg %p150
      $region50: #{linear_ln.1} parent=47 // pred_check_branch
        %510 = sbr.rel (%p508) target = $region52
      $region51: #{linear_ln.1} parent=47 // pred_region
        %s511 = smul.u32 8, %s17
        %p512 = scmp.lt.s32.totalorder %s511, 15
        %s513 = scalar_select %p512, %s511, 15
        %s514 = smul.addr %s513, 8
        %s515 = scalar_lea.vmem %s5, %s514
      $region52: #{linear_ln.1} parent=47 // pred_fallthru
        _
    $region48: #{linear_ln.1} parent=5 // pred_fallthru
      _
  $region6: #{linear_ln.1} parent=0 // loop_footer
    %s15 = sadd.s32 1, %s11
  $region7: #{linear_ln.1} parent=0 // loop_footer_branch
    %10 = sbr.rel target = $region3
  $region8: #{linear_ln.1} parent=0 // loop_exit
    _

</llo_original>
